<compile_context>
chip_gen: v7x
topology: tpu7x:2x2x1
jax: 0.10.0
libtpu: 0.0.40
codegen_flags: <defaults>
</compile_context>

<pallas_src>
import functools

import jax
import jax.numpy as jnp
from jax.experimental import pallas as pl
from jax.experimental.pallas import tpu as pltpu


def convrnn_kernel(x_ref, h_ref, w_ref, b_ref, o_ref, xh_ref, *, din, precision):
    # x_ref: (Din, tL)  input dtype        h_ref: (Dh, tL)  input dtype
    # w_ref: (Dh, Din+Dh) MXU dtype        b_ref: (Dh, 1)   f32 (bx + bh fused)
    # o_ref: (Dh, tL)  output dtype        xh_ref: (Din+Dh, tL) VMEM scratch, MXU dtype
    dh = h_ref.shape[0]
    # Assemble the combined activation tile; the cast to the MXU dtype happens HERE
    # (in-kernel, hidden under DMA), not as a separate wrapper pass over HBM.
    xh_ref[pl.ds(0, din), :] = x_ref[...].astype(xh_ref.dtype)
    xh_ref[pl.ds(din, dh), :] = h_ref[...].astype(xh_ref.dtype)
    # Single MXU dot with K = Din + Dh, accumulating in f32.
    acc = jnp.dot(
        w_ref[...], xh_ref[...],
        preferred_element_type=jnp.float32, precision=precision,
    )
    # f32 epilogue: fused bias + tanh (EUP), then cast to the output dtype.
    o_ref[...] = jnp.tanh(acc + b_ref[...]).astype(o_ref.dtype)


def _vmem_params():
    """Generation-aware (physical-VMEM-aware) tile budget and scoped-VMEM limit."""
    try:
        cap = int(pltpu.get_tpu_info().vmem_capacity_bytes)
    except Exception:
        cap = 64 * 1024 * 1024  # conservative fallback: assume v7x-sized VMEM
    budget = min(cap // 3, 32 * 1024 * 1024)        # working-set budget for tiles
    limit = min((cap * 5) // 8, 64 * 1024 * 1024)   # scoped vmem_limit_bytes
    return budget, limit


def _choose_tile_l(N, L, Din, Dh, in_itemsize, mxu_itemsize, out_itemsize, budget):
    """Pick a lane-dim tile (multiple of 128) from a proper VMEM accounting, and
    guarantee >= 2 grid steps (v7x megacore) whenever L allows splitting."""
    if L <= 128:
        return L  # full-extent block (allowed even when < 128 lanes)
    K = Din + Dh
    # Grid-invariant allocations (worst case: weights + bias double-buffered).
    fixed = 2 * Dh * K * mxu_itemsize + 2 * Dh * 4
    # Bytes per lane column that scale with tL.
    per_col = (
        2 * Din * in_itemsize      # x tile, double-buffered
        + 2 * Dh * in_itemsize     # h tile, double-buffered
        + K * mxu_itemsize         # combined (Din+Dh, tL) scratch, single copy
        + Dh * 4                   # f32 accumulator temporary from the dot
        + 2 * Dh * out_itemsize    # output tile, double-buffered
    )
    avail = max(budget - fixed, 128 * per_col)
    tl = min(L, 2048, max(128, avail // per_col))
    tl = max(128, (tl // 128) * 128)
    # Ensure the grid has at least 2 steps so both TensorCores get work on v7x.
    if N * pl.cdiv(L, tl) < 2:
        half = pl.cdiv(L, 2)
        tl = max(128, pl.cdiv(half, 128) * 128)
    return tl


def conv_rnn_forward(h, x, wx, bx, wh, bh, *,
                     mxu_dtype=jnp.bfloat16, update_h_in_place=False):
    """h: (N, Dh, L), x: (N, Din, L); Conv1d(k=1) weights wx: (Dh, Din),
    wh: (Dh, Dh); biases bx/bh: (Dh,).  Returns new h: (N, Dh, L) in h.dtype."""
    N, Din, L = x.shape
    Dh = wh.shape[0]
    assert h.shape == (N, Dh, L)
    assert wx.shape == (Dh, Din) and wh.shape == (Dh, Dh)
    assert bx.shape == (Dh,) and bh.shape == (Dh,)

    out_dtype = h.dtype
    in_itemsize = max(jnp.dtype(x.dtype).itemsize, jnp.dtype(h.dtype).itemsize)
    mxu_itemsize = jnp.dtype(mxu_dtype).itemsize
    out_itemsize = jnp.dtype(out_dtype).itemsize
    K = Din + Dh

    # Tiny, one-shot weight prep (weights only; activations are NOT touched here).
    w = jnp.concatenate([wx, wh], axis=1).astype(mxu_dtype)            # (Dh, K)
    b = (bx.astype(jnp.float32) + bh.astype(jnp.float32)).reshape(Dh, 1)

    precision = (jax.lax.Precision.HIGHEST
                 if jnp.dtype(mxu_dtype) == jnp.dtype(jnp.float32)
                 else jax.lax.Precision.DEFAULT)

    budget, vmem_limit = _vmem_params()
    tL = _choose_tile_l(N, L, Din, Dh, in_itemsize, mxu_itemsize, out_itemsize, budget)
    grid = (N, pl.cdiv(L, tL))

    cost = pl.CostEstimate(
        flops=2 * N * L * K * Dh,
        transcendentals=N * L * Dh,
        bytes_accessed=(
            N * L * Din * jnp.dtype(x.dtype).itemsize
            + N * L * Dh * jnp.dtype(h.dtype).itemsize
            + N * L * Dh * out_itemsize
            + Dh * K * mxu_itemsize
            + Dh * 4
        ),
    )

    kernel = functools.partial(convrnn_kernel, din=Din, precision=precision)

    call_kwargs = {}
    if update_h_in_place:
        # h (input index 1) aliases the output: in-place RNN state update.
        call_kwargs["input_output_aliases"] = {1: 0}

    return pl.pallas_call(
        kernel,
        out_shape=jax.ShapeDtypeStruct((N, Dh, L), out_dtype),
        grid=grid,
        in_specs=[
            pl.BlockSpec((None, Din, tL), lambda n, l: (n, 0, l)),   # x tile
            pl.BlockSpec((None, Dh, tL), lambda n, l: (n, 0, l)),    # h tile
            pl.BlockSpec((Dh, K), lambda n, l: (0, 0)),              # fused [wx|wh]
            pl.BlockSpec((Dh, 1), lambda n, l: (0, 0)),              # fused bias
        ],
        out_specs=pl.BlockSpec((None, Dh, tL), lambda n, l: (n, 0, l)),
        scratch_shapes=[pltpu.VMEM((K, tL), mxu_dtype)],             # combined x|h tile
        compiler_params=pltpu.CompilerParams(
            dimension_semantics=("parallel", "parallel"),
            vmem_limit_bytes=vmem_limit,
        ),
        cost_estimate=cost,
        **call_kwargs,
    )(x, h, w, b)


if __name__ == "__main__":
    # Shapes consistent with the module defaults (input_dim=128, hidden_dim=64);
    # L is a multiple of 128 so the lane tiling is exercised.
    N, Din, Dh, L = 2, 128, 64, 256

    key = jax.random.PRNGKey(0)
    k_x, k_h, k_wx, k_bx, k_wh, k_bh = jax.random.split(key, 6)

    x = jax.random.normal(k_x, (N, Din, L), dtype=jnp.float32)
    h = jax.random.normal(k_h, (N, Dh, L), dtype=jnp.float32)
    wx = 0.05 * jax.random.normal(k_wx, (Dh, Din), dtype=jnp.float32)
    bx = 0.05 * jax.random.normal(k_bx, (Dh,), dtype=jnp.float32)
    wh = 0.05 * jax.random.normal(k_wh, (Dh, Dh), dtype=jnp.float32)
    bh = 0.05 * jax.random.normal(k_bh, (Dh,), dtype=jnp.float32)

    # Pure-JAX reference (Conv1d kernel_size=1 == per-position linear map).
    ref = jnp.tanh(
        jnp.einsum("oc,ncl->nol", wx, x) + bx[None, :, None]
        + jnp.einsum("oc,ncl->nol", wh, h) + bh[None, :, None]
    )

    # Default path: bf16 MXU operands (cast in-kernel), f32 accumulate + epilogue.
    out = jax.block_until_ready(conv_rnn_forward(h, x, wx, bx, wh, bh))
    assert out.shape == (N, Dh, L) and out.dtype == h.dtype
    assert jnp.allclose(out, ref, atol=3e-2), float(jnp.max(jnp.abs(out - ref)))

    # High-precision path (f32 MXU operands, Precision.HIGHEST): strict tolerance.
    out_f32 = jax.block_until_ready(
        conv_rnn_forward(h, x, wx, bx, wh, bh, mxu_dtype=jnp.float32)
    )
    assert jnp.allclose(out_f32, ref, atol=1e-5, rtol=1e-5)

    # bf16 activations end-to-end (halves HBM traffic; no wrapper cast inside the
    # kernel wrapper — the caller owns the state dtype).
    out_bf16_state = jax.block_until_ready(
        conv_rnn_forward(h.astype(jnp.bfloat16), x.astype(jnp.bfloat16), wx, bx, wh, bh)
    )
    assert out_bf16_state.dtype == jnp.bfloat16
    assert jnp.allclose(out_bf16_state.astype(jnp.float32), ref, atol=5e-2)

    print("KERNEL_OK")
</pallas_src>

<mosaic_0001>
module attributes {stable_mosaic.version = 11 : i64} {
  func.func @convrnn_kernel(%arg0: i32, %arg1: i32, %arg2: memref<1x128x256xf32, #tpu.memory_space<vmem>>, %arg3: memref<1x64x256xf32, #tpu.memory_space<vmem>>, %arg4: memref<64x192xbf16, #tpu.memory_space<vmem>>, %arg5: memref<64x1xf32, #tpu.memory_space<vmem>>, %arg6: memref<1x64x256xf32, #tpu.memory_space<vmem>>, %arg7: memref<192x256xbf16, #tpu.memory_space<vmem>>) attributes {dimension_semantics = [#tpu.dimension_semantics<parallel>, #tpu.dimension_semantics<parallel>], iteration_bounds = array<i64: 2, 1>, scalar_prefetch = 0 : i64, scratch_operands = 1 : i64, tpu.core_type = #tpu.core_type<tc>, window_params = [{transform_indices = @transform_0, window_bounds = array<i64: 1, 128, 256>}, {transform_indices = @transform_1, window_bounds = array<i64: 1, 64, 256>}, {pipeline_mode = #tpu.pipeline_mode<synchronous>, transform_indices = @transform_2, window_bounds = array<i64: 64, 192>}, {pipeline_mode = #tpu.pipeline_mode<synchronous>, transform_indices = @transform_3, window_bounds = array<i64: 64, 1>}, {transform_indices = @transform_4, window_bounds = array<i64: 1, 64, 256>}]} {
    %c0 = arith.constant 0 : index
    %c0_0 = arith.constant 0 : index
    %c0_1 = arith.constant 0 : index
    %0 = vector.load %arg2[%c0, %c0_0, %c0_1] : memref<1x128x256xf32, #tpu.memory_space<vmem>>, vector<1x128x256xf32>
    %1 = vector.shape_cast %0 : vector<1x128x256xf32> to vector<128x256xf32>
    %2 = arith.truncf %1 : vector<128x256xf32> to vector<128x256xbf16>
    %c0_2 = arith.constant 0 : index
    %c0_3 = arith.constant 0 : index
    %3 = vector.load %arg7[%c0_2, %c0_3] : memref<192x256xbf16, #tpu.memory_space<vmem>>, vector<128x256xbf16>
    tpu.vector_store %arg7[%c0_2, %c0_3], %2 {strides = array<i32>} : memref<192x256xbf16, #tpu.memory_space<vmem>>, vector<128x256xbf16>,
    %c0_4 = arith.constant 0 : index
    %c0_5 = arith.constant 0 : index
    %c0_6 = arith.constant 0 : index
    %4 = vector.load %arg3[%c0_4, %c0_5, %c0_6] : memref<1x64x256xf32, #tpu.memory_space<vmem>>, vector<1x64x256xf32>
    %5 = vector.shape_cast %4 : vector<1x64x256xf32> to vector<64x256xf32>
    %6 = arith.truncf %5 : vector<64x256xf32> to vector<64x256xbf16>
    %c128 = arith.constant 128 : index
    %c0_7 = arith.constant 0 : index
    %7 = vector.load %arg7[%c128, %c0_7] : memref<192x256xbf16, #tpu.memory_space<vmem>>, vector<64x256xbf16>
    tpu.vector_store %arg7[%c128, %c0_7], %6 {strides = array<i32>} : memref<192x256xbf16, #tpu.memory_space<vmem>>, vector<64x256xbf16>,
    %c0_8 = arith.constant 0 : index
    %c0_9 = arith.constant 0 : index
    %8 = vector.load %arg4[%c0_8, %c0_9] : memref<64x192xbf16, #tpu.memory_space<vmem>>, vector<64x192xbf16>
    %c0_10 = arith.constant 0 : index
    %c0_11 = arith.constant 0 : index
    %9 = vector.load %arg7[%c0_10, %c0_11] : memref<192x256xbf16, #tpu.memory_space<vmem>>, vector<192x256xbf16>
    %cst = arith.constant dense<0.000000e+00> : vector<64x256xf32>
    %10 = tpu.matmul %8, %9, %cst {dimension_numbers = #tpu.dot_dimension_numbers<[1], [0], [0], [1], [0, 0, 1, 1], [], []>} : vector<64x192xbf16>, vector<192x256xbf16>, vector<64x256xf32> -> vector<64x256xf32>
    %c0_12 = arith.constant 0 : index
    %c0_13 = arith.constant 0 : index
    %11 = vector.load %arg5[%c0_12, %c0_13] : memref<64x1xf32, #tpu.memory_space<vmem>>, vector<64x1xf32>
    %12 = vector.broadcast %11 : vector<64x1xf32> to vector<64x256xf32>
    %13 = arith.addf %10, %12 : vector<64x256xf32>
    %14 = math.tanh %13 : vector<64x256xf32>
    %c0_14 = arith.constant 0 : index
    %c0_15 = arith.constant 0 : index
    %c0_16 = arith.constant 0 : index
    %15 = vector.load %arg6[%c0_14, %c0_15, %c0_16] : memref<1x64x256xf32, #tpu.memory_space<vmem>>, vector<1x64x256xf32>
    %16 = vector.shape_cast %15 : vector<1x64x256xf32> to vector<64x256xf32>
    %17 = vector.shape_cast %14 : vector<64x256xf32> to vector<1x64x256xf32>
    tpu.vector_store %arg6[%c0_14, %c0_15, %c0_16], %17 {strides = array<i32>} : memref<1x64x256xf32, #tpu.memory_space<vmem>>, vector<1x64x256xf32>,
    return
  }
  func.func @transform_0(%arg0: i32, %arg1: i32) -> (i32, i32, i32) {
    %c0_i32 = arith.constant 0 : i32
    %c0_i32_0 = arith.constant 0 : i32
    return %arg0, %c0_i32, %arg1 : i32, i32, i32
  }
  func.func @transform_1(%arg0: i32, %arg1: i32) -> (i32, i32, i32) {
    %c0_i32 = arith.constant 0 : i32
    %c0_i32_0 = arith.constant 0 : i32
    return %arg0, %c0_i32, %arg1 : i32, i32, i32
  }
  func.func @transform_2(%arg0: i32, %arg1: i32) -> (i32, i32) {
    %c0_i32 = arith.constant 0 : i32
    %c0_i32_0 = arith.constant 0 : i32
    %c0_i32_1 = arith.constant 0 : i32
    return %c0_i32, %c0_i32_0 : i32, i32
  }
  func.func @transform_3(%arg0: i32, %arg1: i32) -> (i32, i32) {
    %c0_i32 = arith.constant 0 : i32
    %c0_i32_0 = arith.constant 0 : i32
    %c0_i32_1 = arith.constant 0 : i32
    return %c0_i32, %c0_i32_0 : i32, i32
  }
  func.func @transform_4(%arg0: i32, %arg1: i32) -> (i32, i32, i32) {
    %c0_i32 = arith.constant 0 : i32
    %c0_i32_0 = arith.constant 0 : i32
    return %arg0, %c0_i32, %arg1 : i32, i32, i32
  }
}

</mosaic_0001>

<llo_original>
// kernel: tpu_custom_call.1
$region0: #{tpu_custom_call.1}
  #allocation0 [shape = 'u32[]', space=smem, size = 0x4, offset = 0x4, fixed_abs, tag = 'smem constant byte address 0x4 - core index']
  #allocation1 [shape = 'u32[144,128]{1,0:T(1,128)}', space=vmem, size = 0x12000, scoped, tag = 'internal scratch']
  #allocation2 [shape = 'bf16[192,256]{1,0:T(16,128)(2,1)}', space=vmem, size = 0x18000, scoped, tag = 'scratch operand']
  %s0 = inlined_call_operand.hbm [shape: f32[2,128,256], index: 0, kind: input, shape index: {}]
  %s1 = inlined_call_operand.hbm [shape: f32[2,64,256], index: 1, kind: input, shape index: {}]
  %s2 = inlined_call_operand.vmem [shape: bf16[64,192], index: 2, kind: input, shape index: {}]
  %s3 = inlined_call_operand.vmem [shape: f32[64,1], index: 3, kind: input, shape index: {}]
  %s4 = inlined_call_operand.hbm [shape: f32[2,64,256], index: 4, kind: output, shape index: {}]
  %s5 = sld [smem:[#allocation0]]
  $region57: #{tpu_custom_call.1} parent=0
    _
  %s7 = ssub.s32 1, %s5
  %s8 = scalar_select 0, %s7, %s5
  $region1: #{tpu_custom_call.1} parent=0
    #allocation3 [shape = 'u8[262144]{0}', space=vmem, size = 0x40000, scoped, tag = 'input window, operand 0']
    #allocation4 [shape = 's32[2]{0}', space=sflag, size = 0x8, scoped, tag = 'scoped memory for tpu_custom_call.1']
    #allocation5 [shape = 's32[2]{0}', space=sflag, size = 0x8, scoped, tag = 'scoped memory for tpu_custom_call.1']
    #allocation6 [shape = 'u8[131072]{0}', space=vmem, size = 0x20000, scoped, tag = 'input window, operand 1']
    #allocation7 [shape = 's32[2]{0}', space=sflag, size = 0x8, scoped, tag = 'scoped memory for tpu_custom_call.1']
    #allocation8 [shape = 'u8[131072]{0}', space=vmem, size = 0x20000, scoped, tag = 'output window, operand 0']
    %9 = vsyncpa [#allocation4], 0
    %s10 = scalar_lea.sflag [#allocation4], 1
    %11 = vsyncpa %s10, 0
    %12 = vsyncpa [#allocation7], 0
    %s13 = scalar_lea.sflag [#allocation7], 1
    %14 = vsyncpa %s13, 0
    %15 = vsyncpa [#allocation5], 0
    %s16 = scalar_lea.sflag [#allocation5], 1
    %17 = vsyncpa %s16, 0
    loop: start=0, step=1, limit=4
    $region2: #{tpu_custom_call.1} parent=1 // loop_pre_header
      _
    $region3: #{tpu_custom_call.1} parent=1 // loop_header
      %s19 = sphi 0, %s23
      %p20 = scmp.ge.s32.totalorder %s19, 4
      %s26 = sphi 0, %s38
      %s27 = sphi 0, %s34
      %s28 = sphi 0, %s26
      %s29 = sphi 0, %s27
      %s30 = sphi 0, %s28
      %s31 = sphi 0, %s29
      %s43 = sphi 0, %s45
      %s46 = sphi 0, %s43
      %s47 = sphi 0, %s46
      %s63 = sphi 0, %s47
      %s71 = sphi 0, %s73
      %s74 = sphi 0, %s71
      %s75 = sphi 0, %s74
      %s91 = sphi 0, %s75
      %s95 = sphi 0, %s95
      %s97 = sphi 0, %s95
      %s98 = sphi 0, %s97
      %s112 = sphi 0, %s98
      %s116 = sphi 0, %s116
      %s118 = sphi 0, %s116
      %s119 = sphi 0, %s118
      %s133 = sphi 0, %s119
      %s141 = sphi 0, %s143
      %s144 = sphi 0, %s141
      %s145 = sphi 0, %s144
      %s161 = sphi 0, %s145
    $region4: #{tpu_custom_call.1} parent=1 // loop_header_branch
      %22 = sbr.rel (%p20) target = $region8
    $region5: #{tpu_custom_call.1} parent=1 // loop_body
      %s24 = ssub.s32 %s19, 1
      %s25 = ssub.s32 %s19, 2
      %s32 = sadd.s32 1, %s27
      %p33 = scmp.ge.s32.totalorder %s32, 1
      %s34 = scalar_select %p33, 0, %s32
      %s35 = sadd.s32 1, %s26
      %s36 = scalar_select %p33, %s35, %s26
      %p37 = scmp.ge.s32.totalorder %s36, 2
      %s38 = scalar_select %p37, 0, %s36
      %s39 = ssub.s32 %s26, %s38
      %s40 = ssub.s32 %s27, %s34
      %s41 = sor.u32 %s39, %s40
      %p42 = scmp.eq.s32.totalorder %s41, 0
      %s44 = sadd.s32 %s43, 1
      %s45 = scalar_select %p42, %s43, %s44
      %p48 = pneg %p42
      %p49 = scmp.eq.s32.totalorder %s19, 1
      %p50 = por %p48, %p49
      %p51 = scmp.ne.s32.totalorder %s43, %s46
      %p52 = scmp.eq.s32.totalorder %s19, 0
      %p53 = por %p51, %p52
      %p54 = scmp.ne.s32.totalorder %s43, %s46
      %p55 = scmp.eq.s32.totalorder %s24, 1
      %p56 = por %p54, %p55
      %p57 = scmp.ne.s32.totalorder %s46, %s47
      %p58 = scmp.eq.s32.totalorder %s24, 0
      %p59 = por %p57, %p58
      %p60 = scmp.ne.s32.totalorder %s46, %s47
      %p61 = scmp.eq.s32.totalorder %s25, 1
      %p62 = por %p60, %p61
      %p64 = scmp.ne.s32.totalorder %s47, %s63
      %p65 = scmp.eq.s32.totalorder %s25, 0
      %p66 = por %p64, %p65
      %s67 = ssub.s32 %s26, %s38
      %s68 = ssub.s32 %s27, %s34
      %s69 = sor.u32 %s67, %s68
      %p70 = scmp.eq.s32.totalorder %s69, 0
      %s72 = sadd.s32 %s71, 1
      %s73 = scalar_select %p70, %s71, %s72
      %p76 = pneg %p70
      %p77 = scmp.eq.s32.totalorder %s19, 1
      %p78 = por %p76, %p77
      %p79 = scmp.ne.s32.totalorder %s71, %s74
      %p80 = scmp.eq.s32.totalorder %s19, 0
      %p81 = por %p79, %p80
      %p82 = scmp.ne.s32.totalorder %s71, %s74
      %p83 = scmp.eq.s32.totalorder %s24, 1
      %p84 = por %p82, %p83
      %p85 = scmp.ne.s32.totalorder %s74, %s75
      %p86 = scmp.eq.s32.totalorder %s24, 0
      %p87 = por %p85, %p86
      %p88 = scmp.ne.s32.totalorder %s74, %s75
      %p89 = scmp.eq.s32.totalorder %s25, 1
      %p90 = por %p88, %p89
      %p92 = scmp.ne.s32.totalorder %s75, %s91
      %p93 = scmp.eq.s32.totalorder %s25, 0
      %p94 = por %p92, %p93
      %s96 = sadd.s32 %s95, 1
      %p99 = scmp.eq.s32.totalorder %s19, 1
      %p100 = scmp.ne.s32.totalorder %s95, %s97
      %p101 = scmp.eq.s32.totalorder %s19, 0
      %p102 = por %p100, %p101
      %p103 = scmp.ne.s32.totalorder %s95, %s97
      %p104 = scmp.eq.s32.totalorder %s24, 1
      %p105 = por %p103, %p104
      %p106 = scmp.ne.s32.totalorder %s97, %s98
      %p107 = scmp.eq.s32.totalorder %s24, 0
      %p108 = por %p106, %p107
      %p109 = scmp.ne.s32.totalorder %s97, %s98
      %p110 = scmp.eq.s32.totalorder %s25, 1
      %p111 = por %p109, %p110
      %p113 = scmp.ne.s32.totalorder %s98, %s112
      %p114 = scmp.eq.s32.totalorder %s25, 0
      %p115 = por %p113, %p114
      %s117 = sadd.s32 %s116, 1
      %p120 = scmp.eq.s32.totalorder %s19, 1
      %p121 = scmp.ne.s32.totalorder %s116, %s118
      %p122 = scmp.eq.s32.totalorder %s19, 0
      %p123 = por %p121, %p122
      %p124 = scmp.ne.s32.totalorder %s116, %s118
      %p125 = scmp.eq.s32.totalorder %s24, 1
      %p126 = por %p124, %p125
      %p127 = scmp.ne.s32.totalorder %s118, %s119
      %p128 = scmp.eq.s32.totalorder %s24, 0
      %p129 = por %p127, %p128
      %p130 = scmp.ne.s32.totalorder %s118, %s119
      %p131 = scmp.eq.s32.totalorder %s25, 1
      %p132 = por %p130, %p131
      %p134 = scmp.ne.s32.totalorder %s119, %s133
      %p135 = scmp.eq.s32.totalorder %s25, 0
      %p136 = por %p134, %p135
      %s137 = ssub.s32 %s26, %s38
      %s138 = ssub.s32 %s27, %s34
      %s139 = sor.u32 %s137, %s138
      %p140 = scmp.eq.s32.totalorder %s139, 0
      %s142 = sadd.s32 %s141, 1
      %s143 = scalar_select %p140, %s141, %s142
      %p146 = pneg %p140
      %p147 = scmp.eq.s32.totalorder %s19, 1
      %p148 = por %p146, %p147
      %p149 = scmp.ne.s32.totalorder %s141, %s144
      %p150 = scmp.eq.s32.totalorder %s19, 0
      %p151 = por %p149, %p150
      %p152 = scmp.ne.s32.totalorder %s141, %s144
      %p153 = scmp.eq.s32.totalorder %s24, 1
      %p154 = por %p152, %p153
      %p155 = scmp.ne.s32.totalorder %s144, %s145
      %p156 = scmp.eq.s32.totalorder %s24, 0
      %p157 = por %p155, %p156
      %p158 = scmp.ne.s32.totalorder %s144, %s145
      %p159 = scmp.eq.s32.totalorder %s25, 1
      %p160 = por %p158, %p159
      %p162 = scmp.ne.s32.totalorder %s145, %s161
      %p163 = scmp.eq.s32.totalorder %s25, 0
      %p164 = por %p162, %p163
      %p165 = scmp.le.s32.totalorder 1, %s19
      %p166 = scmp.lt.s32.totalorder %s19, 3
      %p167 = pnand %p165, %p166
      %p168 = pneg %p167
      // Predicated region
      $region9: #{tpu_custom_call.1} parent=5 // pred_check
        _
      $region10: #{tpu_custom_call.1} parent=5 // pred_check_branch
        %170 = sbr.rel (%p167) target = $region12
      $region11: #{tpu_custom_call.1} parent=5 // pred_region
        %s171 = ssub.s32 %s19, 1
        // Predicated region
        $region13: #{tpu_custom_call.1} parent=11 // pred_check
          %p172 = pneg %p108
        $region14: #{tpu_custom_call.1} parent=11 // pred_check_branch
          %174 = sbr.rel (%p172) target = $region16
        $region15: #{tpu_custom_call.1} parent=11 // pred_region
          _
        $region16: #{tpu_custom_call.1} parent=11 // pred_fallthru
          _
        // Predicated region
        $region17: #{tpu_custom_call.1} parent=11 // pred_check
          %p175 = pneg %p129
        $region18: #{tpu_custom_call.1} parent=11 // pred_check_branch
          %177 = sbr.rel (%p175) target = $region20
        $region19: #{tpu_custom_call.1} parent=11 // pred_region
          _
        $region20: #{tpu_custom_call.1} parent=11 // pred_fallthru
          _
      $region12: #{tpu_custom_call.1} parent=5 // pred_fallthru
        _
      %p178 = scmp.lt.s32.totalorder %s19, 2
      // Predicated region
      $region21: #{tpu_custom_call.1} parent=5 // pred_check
        %p179 = pneg %p178
      $region22: #{tpu_custom_call.1} parent=5 // pred_check_branch
        %181 = sbr.rel (%p179) target = $region24
      $region23: #{tpu_custom_call.1} parent=5 // pred_region
        // Predicated region
        $region25: #{tpu_custom_call.1} parent=23 // pred_check
          %p182 = pneg %p53
        $region26: #{tpu_custom_call.1} parent=23 // pred_check_branch
          %184 = sbr.rel (%p182) target = $region28
        $region27: #{tpu_custom_call.1} parent=23 // pred_region
          %s185 = sand.u32 %s43, 1
          %s186 = scalar_lea.sflag [#allocation4], %s185
          %s187 = sand.u32 %s43, 1
          %s188 = smul.addr %s187, 256
          %s189 = scalar_lea.vmem [#allocation3], %s188
          %s190 = smul.u32 2, %s27
          %s192 = ssub.s32 4096, 4096
          %193 = vsyncadd %s186, %s192
          %s194 = smul.addr %s26, 32
          %s195 = sadd.s32 %s190, %s194
          %s196 = smul.addr %s195, 128
          %s197 = scalar_lea.hbm %s0, %s196
          %s198 = sshll.u32 %s189, 4
          %s199 = int_to_ptr.vmem [resolvable:$true] %s198
          %204 = dma.hbm_to_vmem [thread:$0]  %s197, 4096, %s199, %s186, 256, 256, 16
        $region28: #{tpu_custom_call.1} parent=23 // pred_fallthru
          _
        // Predicated region
        $region29: #{tpu_custom_call.1} parent=23 // pred_check
          %p205 = pneg %p81
        $region30: #{tpu_custom_call.1} parent=23 // pred_check_branch
          %207 = sbr.rel (%p205) target = $region32
        $region31: #{tpu_custom_call.1} parent=23 // pred_region
          %s208 = sand.u32 %s71, 1
          %s209 = scalar_lea.sflag [#allocation7], %s208
          %s210 = sand.u32 %s71, 1
          %s211 = smul.addr %s210, 128
          %s212 = scalar_lea.vmem [#allocation6], %s211
          %s213 = smul.u32 2, %s27
          %s215 = ssub.s32 2048, 2048
          %216 = vsyncadd %s209, %s215
          %s217 = smul.addr %s26, 16
          %s218 = sadd.s32 %s213, %s217
          %s219 = smul.addr %s218, 128
          %s220 = scalar_lea.hbm %s1, %s219
          %s221 = sshll.u32 %s212, 4
          %s222 = int_to_ptr.vmem [resolvable:$true] %s221
          %227 = dma.hbm_to_vmem [thread:$0]  %s220, 2048, %s222, %s209, 256, 256, 16
        $region32: #{tpu_custom_call.1} parent=23 // pred_fallthru
          _
      $region24: #{tpu_custom_call.1} parent=5 // pred_fallthru
        _
      %p228 = scmp.le.s32.totalorder 1, %s19
      %p229 = scmp.lt.s32.totalorder %s19, 3
      %p230 = pnand %p228, %p229
      %p231 = pneg %p230
      // Predicated region
      $region33: #{tpu_custom_call.1} parent=5 // pred_check
        _
      $region34: #{tpu_custom_call.1} parent=5 // pred_check_branch
        %233 = sbr.rel (%p230) target = $region36
      $region35: #{tpu_custom_call.1} parent=5 // pred_region
        %s234 = ssub.s32 %s19, 1
        %s235 = sand.u32 %s46, 1
        %s236 = scalar_lea.sflag [#allocation4], %s235
        %s237 = sand.u32 %s46, 1
        %s238 = smul.addr %s237, 256
        %s239 = scalar_lea.vmem [#allocation3], %s238
        // Predicated region
        $region37: #{tpu_custom_call.1} parent=35 // pred_check
          %p240 = pneg %p59
        $region38: #{tpu_custom_call.1} parent=35 // pred_check_branch
          %242 = sbr.rel (%p240) target = $region40
        $region39: #{tpu_custom_call.1} parent=35 // pred_region
          %243 = dma.done %s236, 4096
        $region40: #{tpu_custom_call.1} parent=35 // pred_fallthru
          _
        %s244 = sand.u32 %s74, 1
        %s245 = scalar_lea.sflag [#allocation7], %s244
        %s246 = sand.u32 %s74, 1
        %s247 = smul.addr %s246, 128
        %s248 = scalar_lea.vmem [#allocation6], %s247
        // Predicated region
        $region41: #{tpu_custom_call.1} parent=35 // pred_check
          %p249 = pneg %p87
        $region42: #{tpu_custom_call.1} parent=35 // pred_check_branch
          %251 = sbr.rel (%p249) target = $region44
        $region43: #{tpu_custom_call.1} parent=35 // pred_region
          %252 = dma.done %s245, 2048
        $region44: #{tpu_custom_call.1} parent=35 // pred_fallthru
          _
        %s253 = sand.u32 %s46, 1
        %s254 = scalar_lea.sflag [#allocation4], %s253
        %s255 = sand.u32 %s46, 1
        %s256 = smul.addr %s255, 256
        %s257 = scalar_lea.vmem [#allocation3], %s256
        %p258 = pneg %p59
        %p259 = pneg %p56
        %s260 = sand.u32 %s74, 1
        %s261 = scalar_lea.sflag [#allocation7], %s260
        %s262 = sand.u32 %s74, 1
        %s263 = smul.addr %s262, 128
        %s264 = scalar_lea.vmem [#allocation6], %s263
        %p265 = pneg %p87
        %p266 = pneg %p84
        %p267 = pneg %p108
        %p268 = pneg %p105
        %p269 = pneg %p129
        %p270 = pneg %p126
        %p271 = pneg %p157
        %p272 = pneg %p154
        %s273 = sand.u32 %s144, 1
        %s274 = scalar_lea.sflag [#allocation5], %s273
        %s275 = sand.u32 %s144, 1
        %s276 = smul.addr %s275, 128
        %s277 = scalar_lea.vmem [#allocation8], %s276
        %s278 = smul.u32 2, %s29
        %s279 = smul.u32 2, %s29
        %s280 = smul.u32 2, %s29
        %v282 = vld [vmem:[%s239] sm:$0xff]
        %v283 = vld [vmem:[%s239 + $0x8] sm:$0xff]
        %v284 = vld [vmem:[%s239 + $0x10] sm:$0xff]
        %v285 = vld [vmem:[%s239 + $0x18] sm:$0xff]
        %v286 = vld [vmem:[%s239 + $0x20] sm:$0xff]
        %v287 = vld [vmem:[%s239 + $0x28] sm:$0xff]
        %v288 = vld [vmem:[%s239 + $0x30] sm:$0xff]
        %v289 = vld [vmem:[%s239 + $0x38] sm:$0xff]
        %v290 = vld [vmem:[%s239 + $0x40] sm:$0xff]
        %v291 = vld [vmem:[%s239 + $0x48] sm:$0xff]
        %v292 = vld [vmem:[%s239 + $0x50] sm:$0xff]
        %v293 = vld [vmem:[%s239 + $0x58] sm:$0xff]
        %v294 = vld [vmem:[%s239 + $0x60] sm:$0xff]
        %v295 = vld [vmem:[%s239 + $0x68] sm:$0xff]
        %v296 = vld [vmem:[%s239 + $0x70] sm:$0xff]
        %v297 = vld [vmem:[%s239 + $0x78] sm:$0xff]
        %v298 = vld [vmem:[%s239 + $0x80] sm:$0xff]
        %v299 = vld [vmem:[%s239 + $0x88] sm:$0xff]
        %v300 = vld [vmem:[%s239 + $0x90] sm:$0xff]
        %v301 = vld [vmem:[%s239 + $0x98] sm:$0xff]
        %v302 = vld [vmem:[%s239 + $0xa0] sm:$0xff]
        %v303 = vld [vmem:[%s239 + $0xa8] sm:$0xff]
        %v304 = vld [vmem:[%s239 + $0xb0] sm:$0xff]
        %v305 = vld [vmem:[%s239 + $0xb8] sm:$0xff]
        %v306 = vld [vmem:[%s239 + $0xc0] sm:$0xff]
        %v307 = vld [vmem:[%s239 + $0xc8] sm:$0xff]
        %v308 = vld [vmem:[%s239 + $0xd0] sm:$0xff]
        %v309 = vld [vmem:[%s239 + $0xd8] sm:$0xff]
        %v310 = vld [vmem:[%s239 + $0xe0] sm:$0xff]
        %v311 = vld [vmem:[%s239 + $0xe8] sm:$0xff]
        %v312 = vld [vmem:[%s239 + $0xf0] sm:$0xff]
        %v313 = vld [vmem:[%s239 + $0xf8] sm:$0xff]
        %v314 = vpack.c.bf16 %v284, %v282
        %v315 = vpack.c.bf16 %v285, %v283
        %v316 = vpack.c.bf16 %v288, %v286
        %v317 = vpack.c.bf16 %v289, %v287
        %v318 = vpack.c.bf16 %v292, %v290
        %v319 = vpack.c.bf16 %v293, %v291
        %v320 = vpack.c.bf16 %v296, %v294
        %v321 = vpack.c.bf16 %v297, %v295
        %v322 = vpack.c.bf16 %v300, %v298
        %v323 = vpack.c.bf16 %v301, %v299
        %v324 = vpack.c.bf16 %v304, %v302
        %v325 = vpack.c.bf16 %v305, %v303
        %v326 = vpack.c.bf16 %v308, %v306
        %v327 = vpack.c.bf16 %v309, %v307
        %v328 = vpack.c.bf16 %v312, %v310
        %v329 = vpack.c.bf16 %v313, %v311
        %330 = vst [vmem:[#allocation2] sm:$0xff] %v314
        %331 = vst [vmem:[#allocation2 + $0x8] sm:$0xff] %v315
        %332 = vst [vmem:[#allocation2 + $0x10] sm:$0xff] %v316
        %333 = vst [vmem:[#allocation2 + $0x18] sm:$0xff] %v317
        %334 = vst [vmem:[#allocation2 + $0x20] sm:$0xff] %v318
        %335 = vst [vmem:[#allocation2 + $0x28] sm:$0xff] %v319
        %336 = vst [vmem:[#allocation2 + $0x30] sm:$0xff] %v320
        %337 = vst [vmem:[#allocation2 + $0x38] sm:$0xff] %v321
        %338 = vst [vmem:[#allocation2 + $0x40] sm:$0xff] %v322
        %339 = vst [vmem:[#allocation2 + $0x48] sm:$0xff] %v323
        %340 = vst [vmem:[#allocation2 + $0x50] sm:$0xff] %v324
        %341 = vst [vmem:[#allocation2 + $0x58] sm:$0xff] %v325
        %342 = vst [vmem:[#allocation2 + $0x60] sm:$0xff] %v326
        %343 = vst [vmem:[#allocation2 + $0x68] sm:$0xff] %v327
        %344 = vst [vmem:[#allocation2 + $0x70] sm:$0xff] %v328
        %345 = vst [vmem:[#allocation2 + $0x78] sm:$0xff] %v329
        %v346 = vld [vmem:[%s248] sm:$0xff]
        %v347 = vld [vmem:[%s248 + $0x8] sm:$0xff]
        %v348 = vld [vmem:[%s248 + $0x10] sm:$0xff]
        %v349 = vld [vmem:[%s248 + $0x18] sm:$0xff]
        %v350 = vld [vmem:[%s248 + $0x20] sm:$0xff]
        %v351 = vld [vmem:[%s248 + $0x28] sm:$0xff]
        %v352 = vld [vmem:[%s248 + $0x30] sm:$0xff]
        %v353 = vld [vmem:[%s248 + $0x38] sm:$0xff]
        %v354 = vld [vmem:[%s248 + $0x40] sm:$0xff]
        %v355 = vld [vmem:[%s248 + $0x48] sm:$0xff]
        %v356 = vld [vmem:[%s248 + $0x50] sm:$0xff]
        %v357 = vld [vmem:[%s248 + $0x58] sm:$0xff]
        %v358 = vld [vmem:[%s248 + $0x60] sm:$0xff]
        %v359 = vld [vmem:[%s248 + $0x68] sm:$0xff]
        %v360 = vld [vmem:[%s248 + $0x70] sm:$0xff]
        %v361 = vld [vmem:[%s248 + $0x78] sm:$0xff]
        %v362 = vpack.c.bf16 %v348, %v346
        %v363 = vpack.c.bf16 %v349, %v347
        %v364 = vpack.c.bf16 %v352, %v350
        %v365 = vpack.c.bf16 %v353, %v351
        %v366 = vpack.c.bf16 %v356, %v354
        %v367 = vpack.c.bf16 %v357, %v355
        %v368 = vpack.c.bf16 %v360, %v358
        %v369 = vpack.c.bf16 %v361, %v359
        %370 = vst [vmem:[#allocation2 + $0x80] sm:$0xff] %v362
        %371 = vst [vmem:[#allocation2 + $0x88] sm:$0xff] %v363
        %372 = vst [vmem:[#allocation2 + $0x90] sm:$0xff] %v364
        %373 = vst [vmem:[#allocation2 + $0x98] sm:$0xff] %v365
        %374 = vst [vmem:[#allocation2 + $0xa0] sm:$0xff] %v366
        %375 = vst [vmem:[#allocation2 + $0xa8] sm:$0xff] %v367
        %376 = vst [vmem:[#allocation2 + $0xb0] sm:$0xff] %v368
        %377 = vst [vmem:[#allocation2 + $0xb8] sm:$0xff] %v369
        %v378 = vld [vmem:[%s2] sm:$0xff]
        %v379 = vld [vmem:[%s2 + $0x8] sm:$0xff]
        %v380 = vld [vmem:[%s2 + $0x10] sm:$0xff]
        %v381 = vld [vmem:[%s2 + $0x18] sm:$0xff]
        %v382 = vld [vmem:[%s2 + $0x20] sm:$0xff]
        %v383 = vld [vmem:[%s2 + $0x28] sm:$0xff]
        %v384 = vld [vmem:[%s2 + $0x30] sm:$0xff]
        %v385 = vld [vmem:[%s2 + $0x38] sm:$0xff]
        %v386 = vld [vmem:[#allocation2] sm:$0xff]
        %v387 = vld [vmem:[#allocation2 + $0x8] sm:$0xff]
        %v388 = vld [vmem:[#allocation2 + $0x10] sm:$0xff]
        %v389 = vld [vmem:[#allocation2 + $0x18] sm:$0xff]
        %v390 = vld [vmem:[#allocation2 + $0x20] sm:$0xff]
        %v391 = vld [vmem:[#allocation2 + $0x28] sm:$0xff]
        %v392 = vld [vmem:[#allocation2 + $0x30] sm:$0xff]
        %v393 = vld [vmem:[#allocation2 + $0x38] sm:$0xff]
        %v394 = vld [vmem:[#allocation2 + $0x40] sm:$0xff]
        %v395 = vld [vmem:[#allocation2 + $0x48] sm:$0xff]
        %v396 = vld [vmem:[#allocation2 + $0x50] sm:$0xff]
        %v397 = vld [vmem:[#allocation2 + $0x58] sm:$0xff]
        %v398 = vld [vmem:[#allocation2 + $0x60] sm:$0xff]
        %v399 = vld [vmem:[#allocation2 + $0x68] sm:$0xff]
        %v400 = vld [vmem:[#allocation2 + $0x70] sm:$0xff]
        %v401 = vld [vmem:[#allocation2 + $0x78] sm:$0xff]
        %v402 = vld [vmem:[#allocation2 + $0x80] sm:$0xff]
        %v403 = vld [vmem:[#allocation2 + $0x88] sm:$0xff]
        %v404 = vld [vmem:[#allocation2 + $0x90] sm:$0xff]
        %v405 = vld [vmem:[#allocation2 + $0x98] sm:$0xff]
        %v406 = vld [vmem:[#allocation2 + $0xa0] sm:$0xff]
        %v407 = vld [vmem:[#allocation2 + $0xa8] sm:$0xff]
        %v408 = vld [vmem:[#allocation2 + $0xb0] sm:$0xff]
        %v409 = vld [vmem:[#allocation2 + $0xb8] sm:$0xff]
        %v410 = vld [vmem:[%s3] sm:$0xff]
        %v411 = vld [vmem:[%s3 + $0x8] sm:$0xff]
        %v412 = vld [vmem:[%s3 + $0x10] sm:$0xff]
        %v413 = vld [vmem:[%s3 + $0x18] sm:$0xff]
        %v414 = vld [vmem:[%s3 + $0x20] sm:$0xff]
        %v415 = vld [vmem:[%s3 + $0x28] sm:$0xff]
        %v416 = vld [vmem:[%s3 + $0x30] sm:$0xff]
        %v417 = vld [vmem:[%s3 + $0x38] sm:$0xff]
        %419 = vset.pattern.permute.xlu0 0
        %420 = vperm.xlu0 %419, %v410
        %v421 = vpop.permute.xlu0 %420
        %424 = vset.pattern.permute.xlu0 0
        %425 = vperm.xlu0 %424, %v411
        %v426 = vpop.permute.xlu0 %425
        %429 = vset.pattern.permute.xlu0 0
        %430 = vperm.xlu0 %429, %v412
        %v431 = vpop.permute.xlu0 %430
        %434 = vset.pattern.permute.xlu0 0
        %435 = vperm.xlu0 %434, %v413
        %v436 = vpop.permute.xlu0 %435
        %439 = vset.pattern.permute.xlu0 0
        %440 = vperm.xlu0 %439, %v414
        %v441 = vpop.permute.xlu0 %440
        %444 = vset.pattern.permute.xlu0 0
        %445 = vperm.xlu0 %444, %v415
        %v446 = vpop.permute.xlu0 %445
        %449 = vset.pattern.permute.xlu0 0
        %450 = vperm.xlu0 %449, %v416
        %v451 = vpop.permute.xlu0 %450
        %454 = vset.pattern.permute.xlu0 0
        %455 = vperm.xlu0 %454, %v417
        %v456 = vpop.permute.xlu0 %455
        %v466 = vunpack.c.l.b16 %v378
        %v467 = vunpack.c.h.b16 %v378
        %v468 = vunpack.c.l.b16 %v379
        %v469 = vunpack.c.h.b16 %v379
        %v470 = vunpack.c.l.b16 %v380
        %v471 = vunpack.c.h.b16 %v380
        %v472 = vunpack.c.l.b16 %v381
        %v473 = vunpack.c.h.b16 %v381
        %v474 = vunpack.c.l.b16 %v382
        %v475 = vunpack.c.h.b16 %v382
        %v476 = vunpack.c.l.b16 %v383
        %v477 = vunpack.c.h.b16 %v383
        %v478 = vunpack.c.l.b16 %v384
        %v479 = vunpack.c.h.b16 %v384
        %v480 = vunpack.c.l.b16 %v385
        %v481 = vunpack.c.h.b16 %v385
        %v482 = vpack.c.b16 %v468, %v466
        %v483 = vpack.c.b16 %v469, %v467
        %v484 = vpack.c.b16 %v472, %v470
        %v485 = vpack.c.b16 %v473, %v471
        %v486 = vpack.c.b16 %v476, %v474
        %v487 = vpack.c.b16 %v477, %v475
        %v488 = vpack.c.b16 %v480, %v478
        %v489 = vpack.c.b16 %v481, %v479
        %vm494 = vcmask 523264
        %v496 = vsel %vm494, %v483, 0
        %v499 = vsel %vm494, %v485, 0
        %v502 = vsel %vm494, %v487, 0
        %v505 = vsel %vm494, %v489, 0
        %507 = vmatprep.subr.bf16.mxu0 %v387
        %508 = vmatpush1.bf16.msra.mxu0 %v386
        %509 = vmatprep.subr.bf16.mxu0 %v389
        %510 = vmatpush1.bf16.msra.mxu0 %v388
        %511 = vmatprep.subr.bf16.mxu0 %v391
        %512 = vmatpush1.bf16.msra.mxu0 %v390
        %513 = vmatprep.subr.bf16.mxu0 %v393
        %514 = vmatpush1.bf16.msra.mxu0 %v392
        %515 = vmatprep.subr.bf16.mxu0 %v395
        %516 = vmatpush1.bf16.msra.mxu0 %v394
        %517 = vmatprep.subr.bf16.mxu0 %v397
        %518 = vmatpush1.bf16.msra.mxu0 %v396
        %519 = vmatprep.subr.bf16.mxu0 %v399
        %520 = vmatpush1.bf16.msra.mxu0 %v398
        %521 = vmatprep.subr.bf16.mxu0 %v401
        %522 = vmatpush1.bf16.msra.mxu0 %v400
        %523 = vmatprep.subr.bf16.mxu0 %v403
        %524 = vmatpush1.bf16.msra.mxu0 %v402
        %525 = vmatprep.subr.bf16.mxu0 %v405
        %526 = vmatpush1.bf16.msra.mxu0 %v404
        %527 = vmatprep.subr.bf16.mxu0 %v407
        %528 = vmatpush1.bf16.msra.mxu0 %v406
        %529 = vmatprep.subr.bf16.mxu0 %v409
        %530 = vmatpush1.bf16.msra.mxu0 %v408
        %531 = vmatprep.subr.bf16.mxu0 0
        %532 = vmatpush1.bf16.msra.mxu0 0
        %533 = vmatprep.subr.bf16.mxu0 0
        %534 = vmatpush1.bf16.msra.mxu0 0
        %535 = vmatprep.subr.bf16.mxu0 0
        %536 = vmatpush1.bf16.msra.mxu0 0
        %537 = vmatprep.subr.bf16.mxu0 0
        %538 = vmatpush1.bf16.msra.mxu0 0
        %539 = vmatprep.mubr.bf16.mxu0 %v496
        %540 = vmatmul.mubr.bf16.gmra.mrb[0].mxu0 %v482
        %v541 = vpop.f32.mrb[0].mxu0
        %v542 = vadd.f32 %v421, %v541
        %v543 = vpop.f32.mrb[0].mxu0
        %v544 = vadd.f32 %v421, %v543
        %v545 = vpop.f32.mrb[0].mxu0
        %v546 = vadd.f32 %v426, %v545
        %v547 = vpop.f32.mrb[0].mxu0
        %v548 = vadd.f32 %v426, %v547
        %549 = vmatprep.mubr.bf16.mxu0 %v499
        %550 = vmatmul.mubr.bf16.gmra.mrb[0].mxu0 %v484
        %v551 = vpop.f32.mrb[0].mxu0
        %v552 = vadd.f32 %v431, %v551
        %v553 = vpop.f32.mrb[0].mxu0
        %v554 = vadd.f32 %v431, %v553
        %v555 = vpop.f32.mrb[0].mxu0
        %v556 = vadd.f32 %v436, %v555
        %v557 = vpop.f32.mrb[0].mxu0
        %v558 = vadd.f32 %v436, %v557
        %559 = vmatprep.mubr.bf16.mxu0 %v502
        %560 = vmatmul.mubr.bf16.gmra.mrb[0].mxu0 %v486
        %v561 = vpop.f32.mrb[0].mxu0
        %v562 = vadd.f32 %v441, %v561
        %v563 = vpop.f32.mrb[0].mxu0
        %v564 = vadd.f32 %v441, %v563
        %v565 = vpop.f32.mrb[0].mxu0
        %v566 = vadd.f32 %v446, %v565
        %v567 = vpop.f32.mrb[0].mxu0
        %v568 = vadd.f32 %v446, %v567
        %569 = vmatprep.mubr.bf16.mxu0 %v505
        %570 = vmatmul.mubr.bf16.gmra.mrb[0].mxu0 %v488
        %v571 = vpop.f32.mrb[0].mxu0
        %v572 = vadd.f32 %v451, %v571
        %v573 = vpop.f32.mrb[0].mxu0
        %v574 = vadd.f32 %v451, %v573
        %v575 = vpop.f32.mrb[0].mxu0
        %v576 = vadd.f32 %v456, %v575
        %v577 = vpop.f32.mrb[0].mxu0
        %v578 = vadd.f32 %v456, %v577
        %579 = vdwg.mxu0
        %v580 = vtanh.pop %v542
        %v581 = vtanh.pop %v544
        %v582 = vtanh.pop %v546
        %v583 = vtanh.pop %v548
        %v584 = vtanh.pop %v552
        %v585 = vtanh.pop %v554
        %v586 = vtanh.pop %v556
        %v587 = vtanh.pop %v558
        %v588 = vtanh.pop %v562
        %v589 = vtanh.pop %v564
        %v590 = vtanh.pop %v566
        %v591 = vtanh.pop %v568
        %v592 = vtanh.pop %v572
        %v593 = vtanh.pop %v574
        %v594 = vtanh.pop %v576
        %v595 = vtanh.pop %v578
        %596 = vst [vmem:[%s277] sm:$0xff] %v580
        %597 = vst [vmem:[%s277 + $0x8] sm:$0xff] %v581
        %598 = vst [vmem:[%s277 + $0x10] sm:$0xff] %v582
        %599 = vst [vmem:[%s277 + $0x18] sm:$0xff] %v583
        %600 = vst [vmem:[%s277 + $0x20] sm:$0xff] %v584
        %601 = vst [vmem:[%s277 + $0x28] sm:$0xff] %v585
        %602 = vst [vmem:[%s277 + $0x30] sm:$0xff] %v586
        %603 = vst [vmem:[%s277 + $0x38] sm:$0xff] %v587
        %604 = vst [vmem:[%s277 + $0x40] sm:$0xff] %v588
        %605 = vst [vmem:[%s277 + $0x48] sm:$0xff] %v589
        %606 = vst [vmem:[%s277 + $0x50] sm:$0xff] %v590
        %607 = vst [vmem:[%s277 + $0x58] sm:$0xff] %v591
        %608 = vst [vmem:[%s277 + $0x60] sm:$0xff] %v592
        %609 = vst [vmem:[%s277 + $0x68] sm:$0xff] %v593
        %610 = vst [vmem:[%s277 + $0x70] sm:$0xff] %v594
        %611 = vst [vmem:[%s277 + $0x78] sm:$0xff] %v595
        %s612 = sand.u32 %s144, 1
        %s613 = scalar_lea.sflag [#allocation5], %s612
        %s614 = sand.u32 %s144, 1
        %s615 = smul.addr %s614, 128
        %s616 = scalar_lea.vmem [#allocation8], %s615
        // Predicated region
        $region45: #{tpu_custom_call.1} parent=35 // pred_check
          %p617 = pneg %p154
        $region46: #{tpu_custom_call.1} parent=35 // pred_check_branch
          %619 = sbr.rel (%p617) target = $region48
        $region47: #{tpu_custom_call.1} parent=35 // pred_region
          %s620 = smul.u32 2, %s29
          %s622 = ssub.s32 2048, 2048
          %623 = vsyncadd %s613, %s622
          %s624 = smul.addr %s28, 16
          %s625 = sadd.s32 %s620, %s624
          %s626 = smul.addr %s625, 128
          %s627 = scalar_lea.hbm %s4, %s626
          %s628 = sshll.u32 %s616, 4
          %s629 = int_to_ptr.vmem [resolvable:$true] %s628
          %634 = dma.vmem_to_hbm [thread:$0]  %s629, 2048, %s627, %s613, 256, 256, 16
        $region48: #{tpu_custom_call.1} parent=35 // pred_fallthru
          _
      $region36: #{tpu_custom_call.1} parent=5 // pred_fallthru
        _
      %p635 = scmp.le.s32.totalorder 2, %s19
      // Predicated region
      $region49: #{tpu_custom_call.1} parent=5 // pred_check
        %p636 = pneg %p635
      $region50: #{tpu_custom_call.1} parent=5 // pred_check_branch
        %638 = sbr.rel (%p636) target = $region52
      $region51: #{tpu_custom_call.1} parent=5 // pred_region
        %s639 = ssub.s32 %s19, 2
        // Predicated region
        $region53: #{tpu_custom_call.1} parent=51 // pred_check
          %p640 = pneg %p160
        $region54: #{tpu_custom_call.1} parent=51 // pred_check_branch
          %642 = sbr.rel (%p640) target = $region56
        $region55: #{tpu_custom_call.1} parent=51 // pred_region
          %s643 = sand.u32 %s145, 1
          %s644 = scalar_lea.sflag [#allocation5], %s643
          %s645 = sand.u32 %s145, 1
          %s646 = smul.addr %s645, 128
          %s647 = scalar_lea.vmem [#allocation8], %s646
          %648 = dma.done %s644, 2048
        $region56: #{tpu_custom_call.1} parent=51 // pred_fallthru
          _
      $region52: #{tpu_custom_call.1} parent=5 // pred_fallthru
        _
    $region6: #{tpu_custom_call.1} parent=1 // loop_footer
      %s23 = sadd.s32 1, %s19
    $region7: #{tpu_custom_call.1} parent=1 // loop_footer_branch
      %18 = sbr.rel target = $region3
    $region8: #{tpu_custom_call.1} parent=1 // loop_exit
      _
    %649 = vsyncpa [#allocation4], 1
    %s650 = scalar_lea.sflag [#allocation4], 1
    %651 = vsyncpa %s650, 1
    %652 = vsyncpa [#allocation7], 1
    %s653 = scalar_lea.sflag [#allocation7], 1
    %654 = vsyncpa %s653, 1
    %655 = vsyncpa [#allocation5], 1
    %s656 = scalar_lea.sflag [#allocation5], 1
    %657 = vsyncpa %s656, 1

</llo_original>
